<compile_context>
chip_gen: v5e
topology: v5e:2x2
jax: 0.10.0
libtpu: 0.0.40
codegen_flags: <defaults>
</compile_context>

<pallas_src>
import functools

import jax
import jax.numpy as jnp
from jax import lax
from jax.experimental import pallas as pl
from jax.experimental.pallas import tpu as pltpu


# ---------------------------------------------------------------------------
# Fused pairwise-distance + streaming top-k Pallas kernel
# ---------------------------------------------------------------------------
def _knn_topk_kernel(x_ref, y_ref, xx_ref, yy_ref, idx_ref,
                     run_v_ref, run_i_ref, *, k):
    # Grid: (B, S//tS, P//tP), P innermost (reduction / "arbitrary").
    # x_ref   : (1, C, tP)  original points, channel-first
    # y_ref   : (1, tS, C)  selected points, channel-last
    # xx_ref  : (1, 1, tP)  precomputed ||x_p||^2 (+inf on padded columns)
    # yy_ref  : (1, tS, 1)  precomputed ||y_s||^2
    # idx_ref : (1, tS, k)  output nearest-neighbor indices (written at last P tile)
    # run_*_ref: (tS, k)    running top-k values / global indices (VMEM scratch)
    p = pl.program_id(2)

    @pl.when(p == 0)
    def _init():
        run_v_ref[...] = jnp.full(run_v_ref.shape, -jnp.inf, jnp.float32)
        run_i_ref[...] = jnp.zeros(run_i_ref.shape, jnp.int32)

    x = x_ref[0]                      # (C, tP)
    y = y_ref[0]                      # (tS, C)
    xx = xx_ref[0]                    # (1, tP)
    yy = yy_ref[0]                    # (tS, 1)
    C, tP = x.shape
    tS = y.shape[0]

    # inner[s, p] = <y_s, x_p>.  Tiny C -> unrolled broadcast-FMA on the VPU
    # (avoids a K=3 f32 multi-pass MXU matmul); otherwise MXU.
    if C <= 8:
        inner = y[:, 0:1] * x[0:1, :]
        for c in range(1, C):
            inner = inner + y[:, c:c + 1] * x[c:c + 1, :]
    else:
        inner = jnp.dot(y, x, preferred_element_type=jnp.float32)

    # d[s, p] = -||x_p - y_s||^2   (same expansion as the PyTorch reference)
    d = 2.0 * inner - yy - xx                                   # (tS, tP)

    # --- skip gate: one row-wise tile max, reused as the first pass ----------
    m0 = jnp.max(d, axis=-1, keepdims=True)                     # (tS, 1)
    run_v = run_v_ref[...]                                      # single (tS,k) load
    thresh = run_v[:, k - 1:k]                                  # current k-th best
    improve = jnp.max(jnp.where(m0 > thresh, 1, 0).astype(jnp.int32))

    @pl.when(jnp.logical_or(p == 0, improve > 0))
    def _update():
        run_i = run_i_ref[...]                                  # single (tS,k) load
        col = lax.broadcasted_iota(jnp.int32, (tS, tP), 1)      # tile-local column
        posk = lax.broadcasted_iota(jnp.int32, (tS, k), 1)
        big = jnp.int32(2 ** 30)
        base = p * tP

        dd = d
        rv = run_v
        ri = run_i
        new_v = jnp.full((tS, k), -jnp.inf, jnp.float32)
        new_i = jnp.zeros((tS, k), jnp.int32)

        # k-pass streaming merge of {tile columns} U {running top-k}, all in
        # registers; running entry wins ties, lowest index/slot wins within
        # a source (matches a valid top-k ordering, sorted best-first).
        for j in range(k):
            m_t = m0 if j == 0 else jnp.max(dd, axis=-1, keepdims=True)
            m_r = jnp.max(rv, axis=-1, keepdims=True)
            a_t = jnp.min(jnp.where(dd == m_t, col, big), axis=-1, keepdims=True)
            s_r = jnp.min(jnp.where(rv == m_r, posk, big), axis=-1, keepdims=True)
            i_r = jnp.sum(jnp.where(posk == s_r, ri, 0), axis=-1, keepdims=True)

            take_tile = m_t > m_r                               # (tS, 1) bool
            m = jnp.maximum(m_t, m_r)
            idx = jnp.where(take_tile, a_t + base, i_r)
            new_v = jnp.where(posk == j, m, new_v)
            new_i = jnp.where(posk == j, idx, new_i)

            # consume the chosen element from its source
            dd = jnp.where(take_tile & (col == a_t), -jnp.inf, dd)
            rv = jnp.where(jnp.logical_not(take_tile) & (posk == s_r), -jnp.inf, rv)

        run_v_ref[...] = new_v                                  # one full-width store
        run_i_ref[...] = new_i                                  # one full-width store

    @pl.when(p == pl.num_programs(2) - 1)
    def _write():
        idx_ref[0] = run_i_ref[...]


def _round_up(n, m):
    return ((n + m - 1) // m) * m


def knn_topk(x_cp, y_sc, xx, yy_s1, k, *, ts=64, tp=256):
    """x_cp (B,C,P), y_sc (B,S,C), xx (B,1,P), yy_s1 (B,S,1) -> idx (B,S,k) int32."""
    B, C, P = x_cp.shape
    S = y_sc.shape[1]
    assert 1 <= k <= P, "k must be in [1, P]"

    # (8,128)-aligned tiles; pad S / P rather than falling back to a huge
    # untiled extent.  Padded P columns use xx=+inf -> distance -inf -> never
    # selected; padded S rows are sliced off after the call.
    tS = min(_round_up(max(ts, 8), 8), _round_up(S, 8))
    S_pad = _round_up(S, tS)
    tP = min(_round_up(max(tp, 128), 128), _round_up(P, 128))
    P_pad = _round_up(P, tP)

    if P_pad != P:
        x_cp = jnp.pad(x_cp, ((0, 0), (0, 0), (0, P_pad - P)))
        xx = jnp.pad(xx, ((0, 0), (0, 0), (0, P_pad - P)),
                     constant_values=jnp.inf)
    if S_pad != S:
        y_sc = jnp.pad(y_sc, ((0, 0), (0, S_pad - S), (0, 0)))
        yy_s1 = jnp.pad(yy_s1, ((0, 0), (0, S_pad - S), (0, 0)))

    grid = (B, S_pad // tS, P_pad // tP)

    # Selection-aware estimate: distance (~2C) + k selection passes (~6k)
    # vector ops per (s, p); bytes include the per-S-tile x / xx re-reads.
    cost = pl.CostEstimate(
        flops=(2 * C + 6 * k) * B * S_pad * P_pad,
        transcendentals=0,
        bytes_accessed=4 * B * ((S_pad // tS) * (C + 1) * P_pad
                                + S_pad * (C + 1) + S_pad * k),
    )

    # Right-sized scoped VMEM: tiles + scratch are tiny, leave slack for the
    # compiler-managed d/col working set.  ~16 MiB at the default tiles.
    vmem_limit = min(48 * 1024 * 1024,
                     max(16 * 1024 * 1024, 24 * tS * tP * 4))

    idx = pl.pallas_call(
        functools.partial(_knn_topk_kernel, k=k),
        out_shape=jax.ShapeDtypeStruct((B, S_pad, k), jnp.int32),
        grid_spec=pltpu.PrefetchScalarGridSpec(
            num_scalar_prefetch=0,
            grid=grid,
            in_specs=[
                pl.BlockSpec((1, C, tP), lambda b, s, p: (b, 0, p)),   # x
                pl.BlockSpec((1, tS, C), lambda b, s, p: (b, s, 0)),   # y
                pl.BlockSpec((1, 1, tP), lambda b, s, p: (b, 0, p)),   # xx
                pl.BlockSpec((1, tS, 1), lambda b, s, p: (b, s, 0)),   # yy
            ],
            out_specs=pl.BlockSpec((1, tS, k), lambda b, s, p: (b, s, 0)),
            scratch_shapes=[
                pltpu.VMEM((tS, k), jnp.float32),   # running top-k values
                pltpu.VMEM((tS, k), jnp.int32),     # running top-k indices
            ],
        ),
        compiler_params=pltpu.CompilerParams(
            # TODO(synk): on v7x, pltpu.CORE_PARALLEL on the B (or S) axis would
            # shard the grid across the 2 TensorCores; kept portable here.
            dimension_semantics=("parallel", "parallel", "arbitrary"),
            vmem_limit_bytes=vmem_limit,
        ),
        cost_estimate=cost,
    )(x_cp, y_sc, xx, yy_s1)

    return idx[:, :S, :] if S_pad != S else idx


def knn(x, x2, k, *, ts=64, tp=256):
    """x: (B, C, P) original, x2: (B, C, S) selected -> (B, k, S) nearest indices
    (matches torch pairwise_distance.topk(k, dim=-2)[1], sorted best-first)."""
    xf = x.astype(jnp.float32)
    yf = x2.astype(jnp.float32)
    xx = jnp.sum(xf * xf, axis=1, keepdims=True)              # (B, 1, P)
    yy = jnp.sum(yf * yf, axis=1, keepdims=True)              # (B, 1, S)
    y_sc = jnp.transpose(yf, (0, 2, 1))                       # (B, S, C)  (tiny copy)
    yy_s1 = jnp.transpose(yy, (0, 2, 1))                      # (B, S, 1)
    idx_sk = knn_topk(xf, y_sc, xx, yy_s1, k, ts=ts, tp=tp)   # (B, S, k)
    return jnp.transpose(idx_sk, (0, 2, 1))                   # (B, k, S) tiny int32

# ---------------------------------------------------------------------------
# Dynamic_sampling.forward
# ---------------------------------------------------------------------------
def dynamic_sampling(x, s_num, k, key, Is_temp=False, Temp_ratio=0):
    # TODO(synk): random sampling / argsort selection and the final feature
    # gather stay in XLA (data-dependent sort + gathers; no clean Pallas win).
    B, C, P = x.shape
    rand_num = jax.random.uniform(key, (B, P), dtype=x.dtype)   # ~ torch.rand

    if s_num <= P:
        rand_num = jnp.abs(rand_num)
        if Is_temp:
            assert Temp_ratio > 0
            Temp_point = max(1, int(s_num * Temp_ratio))
            Temp_point = min(Temp_point, s_num)   # guard degenerate -0 tail slice
            act = x[:, 3, :]
            act = 1.0 - jnp.abs(act) * 2.0
            rand_num = rand_num * act
            order = jnp.argsort(rand_num, axis=1)
            if Temp_point == s_num:
                perm = order[:, :s_num]
            else:
                perm = jnp.concatenate(
                    [order[:, :Temp_point], order[:, -(s_num - Temp_point):]],
                    axis=1)
        else:
            perm = jnp.argsort(rand_num, axis=1)[:, :s_num]
        select_point = jnp.take_along_axis(x, perm[:, None, :], axis=2)
    else:
        perm = jnp.argsort(rand_num, axis=1)[:, : s_num - P]
        extra = jnp.take_along_axis(x, perm[:, None, :], axis=2)
        select_point = jnp.concatenate([x, extra], axis=2)

    if C == 4:
        indx = knn(x[:, :3, :], select_point[:, :3, :], k)      # (B, k, s_num)
    else:
        indx = knn(x, select_point, k)
    assert select_point.shape[2] == s_num

    # Gather features exactly as the torch code does (flat (b, k, s) ordering
    # re-viewed as (B, s_num, k, C)).
    x_t = jnp.transpose(x, (0, 2, 1))                           # (B, P, C)
    flat_idx = indx.reshape(B, k * s_num)                       # (B, k*s_num)
    feature = jnp.take_along_axis(x_t, flat_idx[:, :, None], axis=1)  # (B, k*S, C)
    feature = feature.reshape(B, s_num, k, C)                   # torch .view semantics
    return jnp.transpose(feature, (0, 3, 1, 2))                 # (B, C, s_num, k)


# ---------------------------------------------------------------------------
if __name__ == "__main__":
    key = jax.random.PRNGKey(0)
    k_data, k_samp, k_big, k_pad = jax.random.split(key, 4)

    # Small shapes consistent with the module.
    B, C, P = 2, 4, 16
    s_num, k_nn = 8, 4
    x = jax.random.normal(k_data, (B, C, P), dtype=jnp.float32)

    out = jax.block_until_ready(dynamic_sampling(x, s_num, k_nn, k_samp))
    assert out.shape == (B, C, s_num, k_nn), out.shape

    # Pure-JAX reference for the fused distance + top-k kernel.
    def ref_dist_topk(x3, y3, kk):
        xx = jnp.sum(x3 * x3, axis=1, keepdims=True)            # (B, 1, P)
        yy = jnp.sum(y3 * y3, axis=1, keepdims=True)            # (B, 1, S)
        inner = jnp.einsum("bcs,bcp->bsp", y3, x3,
                           preferred_element_type=jnp.float32)
        d = 2.0 * inner - jnp.transpose(yy, (0, 2, 1)) - xx     # (B, S, P)
        vals, _ = lax.top_k(d, kk)
        return d, vals

    # --- sanity check 1: tiny single-tile path (P padded 16 -> 128) ----------
    x3 = x[:, :3, :]
    y3 = x3[:, :, :s_num]                                        # (B, 3, S)
    d_ref, ref_vals = ref_dist_topk(x3, y3, k_nn)
    ker_idx = jnp.transpose(knn(x3, y3, k_nn), (0, 2, 1))        # (B, S, k)
    assert bool(jnp.all((ker_idx >= 0) & (ker_idx < P)))
    got_vals = jnp.take_along_axis(d_ref, ker_idx, axis=-1)
    assert jnp.allclose(jnp.sort(got_vals, -1), jnp.sort(ref_vals, -1),
                        atol=1e-4), "fused top-k mismatch (single tile)"

    # --- sanity check 2: tiled S/P merge + gated-skip path (grid (2,2,2)) ----
    B2, P2, S2 = 2, 256, 16
    xb = jax.random.normal(k_big, (B2, 3, P2), dtype=jnp.float32)
    yb = xb[:, :, :S2]
    d_ref2, ref_vals2 = ref_dist_topk(xb, yb, k_nn)
    ker_idx2 = jnp.transpose(knn(xb, yb, k_nn, ts=8, tp=128), (0, 2, 1))
    got_vals2 = jnp.take_along_axis(d_ref2, ker_idx2, axis=-1)
    assert jnp.allclose(jnp.sort(got_vals2, -1), jnp.sort(ref_vals2, -1),
                        atol=1e-3), "fused top-k mismatch (tiled)"

    # --- sanity check 3: non-divisible P/S exercise padding + inf sentinel ---
    B3, P3, S3 = 2, 200, 12
    xc = jax.random.normal(k_pad, (B3, 3, P3), dtype=jnp.float32)
    yc = xc[:, :, :S3]
    d_ref3, ref_vals3 = ref_dist_topk(xc, yc, k_nn)
    ker_idx3 = jnp.transpose(knn(xc, yc, k_nn, ts=8, tp=128), (0, 2, 1))
    assert bool(jnp.all((ker_idx3 >= 0) & (ker_idx3 < P3))), "padded point selected"
    got_vals3 = jnp.take_along_axis(d_ref3, ker_idx3, axis=-1)
    assert jnp.allclose(jnp.sort(got_vals3, -1), jnp.sort(ref_vals3, -1),
                        atol=1e-3), "fused top-k mismatch (padded)"

    print("KERNEL_OK")
</pallas_src>

<mosaic_0001>
module attributes {stable_mosaic.version = 11 : i64} {
  func.func @_knn_topk_kernel(%arg0: i32, %arg1: i32, %arg2: i32, %arg3: memref<1x3x128xf32, #tpu.memory_space<vmem>>, %arg4: memref<1x8x3xf32, #tpu.memory_space<vmem>>, %arg5: memref<1x1x128xf32, #tpu.memory_space<vmem>>, %arg6: memref<1x8x1xf32, #tpu.memory_space<vmem>>, %arg7: memref<1x8x4xi32, #tpu.memory_space<vmem>>, %arg8: memref<8x4xf32, #tpu.memory_space<vmem>>, %arg9: memref<8x4xi32, #tpu.memory_space<vmem>>) attributes {dimension_semantics = [#tpu.dimension_semantics<parallel>, #tpu.dimension_semantics<parallel>, #tpu.dimension_semantics<arbitrary>], iteration_bounds = array<i64: 2, 1, 1>, scalar_prefetch = 0 : i64, scratch_operands = 2 : i64, tpu.core_type = #tpu.core_type<tc>, window_params = [{transform_indices = @transform_0, window_bounds = array<i64: 1, 3, 128>}, {transform_indices = @transform_1, window_bounds = array<i64: 1, 8, 3>}, {transform_indices = @transform_2, window_bounds = array<i64: 1, 1, 128>}, {transform_indices = @transform_3, window_bounds = array<i64: 1, 8, 1>}, {transform_indices = @transform_4, window_bounds = array<i64: 1, 8, 4>}]} {
    %c0_i32 = arith.constant 0 : i32
    %0 = arith.cmpi eq, %arg2, %c0_i32 : i32
    %1 = arith.extui %0 : i1 to i32
    %c0_i32_0 = arith.constant 0 : i32
    %2 = arith.cmpi ne, %1, %c0_i32_0 : i32
    scf.if %2 {
      %cst_22 = arith.constant 0xFF800000 : f32
      %54 = vector.broadcast %cst_22 : f32 to vector<8x4xf32>
      %c0_23 = arith.constant 0 : index
      %c0_24 = arith.constant 0 : index
      %55 = vector.load %arg8[%c0_23, %c0_24] : memref<8x4xf32, #tpu.memory_space<vmem>>, vector<8x4xf32>
      tpu.vector_store %arg8[%c0_23, %c0_24], %54 {strides = array<i32>} : memref<8x4xf32, #tpu.memory_space<vmem>>, vector<8x4xf32>,
      %c0_i32_25 = arith.constant 0 : i32
      %56 = vector.broadcast %c0_i32_25 : i32 to vector<8x4xi32>
      %c0_26 = arith.constant 0 : index
      %c0_27 = arith.constant 0 : index
      %57 = vector.load %arg9[%c0_26, %c0_27] : memref<8x4xi32, #tpu.memory_space<vmem>>, vector<8x4xi32>
      tpu.vector_store %arg9[%c0_26, %c0_27], %56 {strides = array<i32>} : memref<8x4xi32, #tpu.memory_space<vmem>>, vector<8x4xi32>,
    } else {
    }
    %c0 = arith.constant 0 : index
    %c0_1 = arith.constant 0 : index
    %c0_2 = arith.constant 0 : index
    %3 = vector.load %arg3[%c0, %c0_1, %c0_2] : memref<1x3x128xf32, #tpu.memory_space<vmem>>, vector<1x3x128xf32>
    %4 = vector.shape_cast %3 : vector<1x3x128xf32> to vector<3x128xf32>
    %c0_3 = arith.constant 0 : index
    %c0_4 = arith.constant 0 : index
    %c0_5 = arith.constant 0 : index
    %5 = vector.load %arg4[%c0_3, %c0_4, %c0_5] : memref<1x8x3xf32, #tpu.memory_space<vmem>>, vector<1x8x3xf32>
    %6 = vector.shape_cast %5 : vector<1x8x3xf32> to vector<8x3xf32>
    %c0_6 = arith.constant 0 : index
    %c0_7 = arith.constant 0 : index
    %c0_8 = arith.constant 0 : index
    %7 = vector.load %arg5[%c0_6, %c0_7, %c0_8] : memref<1x1x128xf32, #tpu.memory_space<vmem>>, vector<1x1x128xf32>
    %8 = vector.shape_cast %7 : vector<1x1x128xf32> to vector<1x128xf32>
    %c0_9 = arith.constant 0 : index
    %c0_10 = arith.constant 0 : index
    %c0_11 = arith.constant 0 : index
    %9 = vector.load %arg6[%c0_9, %c0_10, %c0_11] : memref<1x8x1xf32, #tpu.memory_space<vmem>>, vector<1x8x1xf32>
    %10 = vector.shape_cast %9 : vector<1x8x1xf32> to vector<8x1xf32>
    %11 = vector.extract_strided_slice %6 {offsets = [0, 0], sizes = [8, 1], strides = [1, 1]} : vector<8x3xf32> to vector<8x1xf32>
    %12 = vector.extract_strided_slice %4 {offsets = [0, 0], sizes = [1, 128], strides = [1, 1]} : vector<3x128xf32> to vector<1x128xf32>
    %13 = vector.broadcast %11 : vector<8x1xf32> to vector<8x128xf32>
    %14 = vector.broadcast %12 : vector<1x128xf32> to vector<8x128xf32>
    %15 = arith.mulf %13, %14 : vector<8x128xf32>
    %16 = vector.extract_strided_slice %6 {offsets = [0, 1], sizes = [8, 1], strides = [1, 1]} : vector<8x3xf32> to vector<8x1xf32>
    %17 = vector.extract_strided_slice %4 {offsets = [1, 0], sizes = [1, 128], strides = [1, 1]} : vector<3x128xf32> to vector<1x128xf32>
    %18 = vector.broadcast %16 : vector<8x1xf32> to vector<8x128xf32>
    %19 = vector.broadcast %17 : vector<1x128xf32> to vector<8x128xf32>
    %20 = arith.mulf %18, %19 : vector<8x128xf32>
    %21 = arith.addf %15, %20 : vector<8x128xf32>
    %22 = vector.extract_strided_slice %6 {offsets = [0, 2], sizes = [8, 1], strides = [1, 1]} : vector<8x3xf32> to vector<8x1xf32>
    %23 = vector.extract_strided_slice %4 {offsets = [2, 0], sizes = [1, 128], strides = [1, 1]} : vector<3x128xf32> to vector<1x128xf32>
    %24 = vector.broadcast %22 : vector<8x1xf32> to vector<8x128xf32>
    %25 = vector.broadcast %23 : vector<1x128xf32> to vector<8x128xf32>
    %26 = arith.mulf %24, %25 : vector<8x128xf32>
    %27 = arith.addf %21, %26 : vector<8x128xf32>
    %cst = arith.constant 2.000000e+00 : f32
    %28 = vector.broadcast %cst : f32 to vector<8x128xf32>
    %29 = arith.mulf %28, %27 : vector<8x128xf32>
    %30 = vector.broadcast %10 : vector<8x1xf32> to vector<8x128xf32>
    %31 = arith.subf %29, %30 : vector<8x128xf32>
    %32 = vector.broadcast %8 : vector<1x128xf32> to vector<8x128xf32>
    %33 = arith.subf %31, %32 : vector<8x128xf32>
    %cst_12 = arith.constant dense<0xFF800000> : vector<8xf32>
    %34 = vector.multi_reduction <maximumf>, %33, %cst_12 [1] : vector<8x128xf32> to vector<8xf32>
    %35 = vector.shape_cast %34 : vector<8xf32> to vector<8x1xf32>
    %c0_13 = arith.constant 0 : index
    %c0_14 = arith.constant 0 : index
    %36 = vector.load %arg8[%c0_13, %c0_14] : memref<8x4xf32, #tpu.memory_space<vmem>>, vector<8x4xf32>
    %37 = vector.extract_strided_slice %36 {offsets = [0, 3], sizes = [8, 1], strides = [1, 1]} : vector<8x4xf32> to vector<8x1xf32>
    %38 = arith.cmpf ogt, %35, %37 : vector<8x1xf32>
    %c1_i32 = arith.constant 1 : i32
    %c0_i32_15 = arith.constant 0 : i32
    %39 = vector.broadcast %c1_i32 : i32 to vector<8x1xi32>
    %40 = vector.broadcast %c0_i32_15 : i32 to vector<8x1xi32>
    %41 = arith.select %38, %39, %40 : vector<8x1xi1>, vector<8x1xi32>
    %42 = vector.shape_cast %41 : vector<8x1xi32> to vector<1x8x1xi32>
    %cst_16 = arith.constant dense<-2147483648> : vector<1xi32>
    %43 = vector.multi_reduction <maxsi>, %42, %cst_16 [1, 2] : vector<1x8x1xi32> to vector<1xi32>
    %44 = vector.shape_cast %43 : vector<1xi32> to vector<1x1x1xi32>
    %45 = vector.extract %44[0, 0, 0] : i32 from vector<1x1x1xi32>
    %c0_i32_17 = arith.constant 0 : i32
    %46 = arith.cmpi eq, %arg2, %c0_i32_17 : i32
    %c0_i32_18 = arith.constant 0 : i32
    %47 = arith.cmpi sgt, %45, %c0_i32_18 : i32
    %48 = arith.ori %46, %47 : i1
    %49 = arith.extui %48 : i1 to i32
    %c0_i32_19 = arith.constant 0 : i32
    %50 = arith.cmpi ne, %49, %c0_i32_19 : i32
    scf.if %50 {
      %c0_22 = arith.constant 0 : index
      %c0_23 = arith.constant 0 : index
      %54 = vector.load %arg9[%c0_22, %c0_23] : memref<8x4xi32, #tpu.memory_space<vmem>>, vector<8x4xi32>
      %55 = tpu.iota {dimensions = array<i32: 1>} : vector<8x128xi32>
      %56 = tpu.iota {dimensions = array<i32: 1>} : vector<8x4xi32>
      %c128_i32 = arith.constant 128 : i32
      %57 = arith.muli %arg2, %c128_i32 : i32
      %cst_24 = arith.constant 0xFF800000 : f32
      %58 = vector.broadcast %cst_24 : f32 to vector<8x4xf32>
      %c0_i32_25 = arith.constant 0 : i32
      %59 = vector.broadcast %c0_i32_25 : i32 to vector<8x4xi32>
      %cst_26 = arith.constant dense<0xFF800000> : vector<8xf32>
      %60 = vector.multi_reduction <maximumf>, %36, %cst_26 [1] : vector<8x4xf32> to vector<8xf32>
      %61 = vector.shape_cast %60 : vector<8xf32> to vector<8x1xf32>
      %62 = vector.broadcast %35 : vector<8x1xf32> to vector<8x128xf32>
      %63 = arith.cmpf oeq, %33, %62 : vector<8x128xf32>
      %c1073741824_i32 = arith.constant 1073741824 : i32
      %64 = vector.broadcast %c1073741824_i32 : i32 to vector<8x128xi32>
      %65 = arith.select %63, %55, %64 : vector<8x128xi1>, vector<8x128xi32>
      %cst_27 = arith.constant dense<2147483647> : vector<8xi32>
      %66 = vector.multi_reduction <minsi>, %65, %cst_27 [1] : vector<8x128xi32> to vector<8xi32>
      %67 = vector.shape_cast %66 : vector<8xi32> to vector<8x1xi32>
      %68 = vector.broadcast %61 : vector<8x1xf32> to vector<8x4xf32>
      %69 = arith.cmpf oeq, %36, %68 : vector<8x4xf32>
      %c1073741824_i32_28 = arith.constant 1073741824 : i32
      %70 = vector.broadcast %c1073741824_i32_28 : i32 to vector<8x4xi32>
      %71 = arith.select %69, %56, %70 : vector<8x4xi1>, vector<8x4xi32>
      %cst_29 = arith.constant dense<2147483647> : vector<8xi32>
      %72 = vector.multi_reduction <minsi>, %71, %cst_29 [1] : vector<8x4xi32> to vector<8xi32>
      %73 = vector.shape_cast %72 : vector<8xi32> to vector<8x1xi32>
      %74 = vector.broadcast %73 : vector<8x1xi32> to vector<8x4xi32>
      %75 = arith.cmpi eq, %56, %74 : vector<8x4xi32>
      %c0_i32_30 = arith.constant 0 : i32
      %76 = vector.broadcast %c0_i32_30 : i32 to vector<8x4xi32>
      %77 = arith.select %75, %54, %76 : vector<8x4xi1>, vector<8x4xi32>
      %cst_31 = arith.constant dense<0> : vector<8xi32>
      %78 = vector.multi_reduction <add>, %77, %cst_31 [1] : vector<8x4xi32> to vector<8xi32>
      %79 = vector.shape_cast %78 : vector<8xi32> to vector<8x1xi32>
      %80 = arith.cmpf ogt, %35, %61 : vector<8x1xf32>
      %81 = arith.maximumf %35, %61 : vector<8x1xf32>
      %82 = vector.broadcast %57 : i32 to vector<8x1xi32>
      %83 = arith.addi %67, %82 : vector<8x1xi32>
      %84 = arith.select %80, %83, %79 : vector<8x1xi1>, vector<8x1xi32>
      %c0_i32_32 = arith.constant 0 : i32
      %85 = vector.broadcast %c0_i32_32 : i32 to vector<8x4xi32>
      %86 = arith.cmpi eq, %56, %85 : vector<8x4xi32>
      %87 = vector.shape_cast %81 : vector<8x1xf32> to vector<8x1xf32>
      %88 = vector.broadcast %87 : vector<8x1xf32> to vector<8x4xf32>
      %89 = arith.select %86, %88, %58 : vector<8x4xi1>, vector<8x4xf32>
      %c0_i32_33 = arith.constant 0 : i32
      %90 = vector.broadcast %c0_i32_33 : i32 to vector<8x4xi32>
      %91 = arith.cmpi eq, %56, %90 : vector<8x4xi32>
      %92 = vector.shape_cast %84 : vector<8x1xi32> to vector<8x1xi32>
      %93 = vector.broadcast %92 : vector<8x1xi32> to vector<8x4xi32>
      %94 = arith.select %91, %93, %59 : vector<8x4xi1>, vector<8x4xi32>
      %95 = vector.broadcast %67 : vector<8x1xi32> to vector<8x128xi32>
      %96 = arith.cmpi eq, %55, %95 : vector<8x128xi32>
      %97 = vector.broadcast %80 : vector<8x1xi1> to vector<8x128xi1>
      %98 = arith.andi %97, %96 : vector<8x128xi1>
      %cst_34 = arith.constant 0xFF800000 : f32
      %99 = vector.broadcast %cst_34 : f32 to vector<8x128xf32>
      %100 = arith.select %98, %99, %33 : vector<8x128xi1>, vector<8x128xf32>
      %cst_35 = arith.constant dense<true> : vector<8x1xi1>
      %101 = arith.xori %80, %cst_35 : vector<8x1xi1>
      %102 = vector.broadcast %73 : vector<8x1xi32> to vector<8x4xi32>
      %103 = arith.cmpi eq, %56, %102 : vector<8x4xi32>
      %104 = vector.broadcast %101 : vector<8x1xi1> to vector<8x4xi1>
      %105 = arith.andi %104, %103 : vector<8x4xi1>
      %cst_36 = arith.constant 0xFF800000 : f32
      %106 = vector.broadcast %cst_36 : f32 to vector<8x4xf32>
      %107 = arith.select %105, %106, %36 : vector<8x4xi1>, vector<8x4xf32>
      %cst_37 = arith.constant dense<0xFF800000> : vector<8xf32>
      %108 = vector.multi_reduction <maximumf>, %100, %cst_37 [1] : vector<8x128xf32> to vector<8xf32>
      %109 = vector.shape_cast %108 : vector<8xf32> to vector<8x1xf32>
      %cst_38 = arith.constant dense<0xFF800000> : vector<8xf32>
      %110 = vector.multi_reduction <maximumf>, %107, %cst_38 [1] : vector<8x4xf32> to vector<8xf32>
      %111 = vector.shape_cast %110 : vector<8xf32> to vector<8x1xf32>
      %112 = vector.broadcast %109 : vector<8x1xf32> to vector<8x128xf32>
      %113 = arith.cmpf oeq, %100, %112 : vector<8x128xf32>
      %c1073741824_i32_39 = arith.constant 1073741824 : i32
      %114 = vector.broadcast %c1073741824_i32_39 : i32 to vector<8x128xi32>
      %115 = arith.select %113, %55, %114 : vector<8x128xi1>, vector<8x128xi32>
      %cst_40 = arith.constant dense<2147483647> : vector<8xi32>
      %116 = vector.multi_reduction <minsi>, %115, %cst_40 [1] : vector<8x128xi32> to vector<8xi32>
      %117 = vector.shape_cast %116 : vector<8xi32> to vector<8x1xi32>
      %118 = vector.broadcast %111 : vector<8x1xf32> to vector<8x4xf32>
      %119 = arith.cmpf oeq, %107, %118 : vector<8x4xf32>
      %c1073741824_i32_41 = arith.constant 1073741824 : i32
      %120 = vector.broadcast %c1073741824_i32_41 : i32 to vector<8x4xi32>
      %121 = arith.select %119, %56, %120 : vector<8x4xi1>, vector<8x4xi32>
      %cst_42 = arith.constant dense<2147483647> : vector<8xi32>
      %122 = vector.multi_reduction <minsi>, %121, %cst_42 [1] : vector<8x4xi32> to vector<8xi32>
      %123 = vector.shape_cast %122 : vector<8xi32> to vector<8x1xi32>
      %124 = vector.broadcast %123 : vector<8x1xi32> to vector<8x4xi32>
      %125 = arith.cmpi eq, %56, %124 : vector<8x4xi32>
      %c0_i32_43 = arith.constant 0 : i32
      %126 = vector.broadcast %c0_i32_43 : i32 to vector<8x4xi32>
      %127 = arith.select %125, %54, %126 : vector<8x4xi1>, vector<8x4xi32>
      %cst_44 = arith.constant dense<0> : vector<8xi32>
      %128 = vector.multi_reduction <add>, %127, %cst_44 [1] : vector<8x4xi32> to vector<8xi32>
      %129 = vector.shape_cast %128 : vector<8xi32> to vector<8x1xi32>
      %130 = arith.cmpf ogt, %109, %111 : vector<8x1xf32>
      %131 = arith.maximumf %109, %111 : vector<8x1xf32>
      %132 = vector.broadcast %57 : i32 to vector<8x1xi32>
      %133 = arith.addi %117, %132 : vector<8x1xi32>
      %134 = arith.select %130, %133, %129 : vector<8x1xi1>, vector<8x1xi32>
      %c1_i32_45 = arith.constant 1 : i32
      %135 = vector.broadcast %c1_i32_45 : i32 to vector<8x4xi32>
      %136 = arith.cmpi eq, %56, %135 : vector<8x4xi32>
      %137 = vector.shape_cast %131 : vector<8x1xf32> to vector<8x1xf32>
      %138 = vector.broadcast %137 : vector<8x1xf32> to vector<8x4xf32>
      %139 = arith.select %136, %138, %89 : vector<8x4xi1>, vector<8x4xf32>
      %c1_i32_46 = arith.constant 1 : i32
      %140 = vector.broadcast %c1_i32_46 : i32 to vector<8x4xi32>
      %141 = arith.cmpi eq, %56, %140 : vector<8x4xi32>
      %142 = vector.shape_cast %134 : vector<8x1xi32> to vector<8x1xi32>
      %143 = vector.broadcast %142 : vector<8x1xi32> to vector<8x4xi32>
      %144 = arith.select %141, %143, %94 : vector<8x4xi1>, vector<8x4xi32>
      %145 = vector.broadcast %117 : vector<8x1xi32> to vector<8x128xi32>
      %146 = arith.cmpi eq, %55, %145 : vector<8x128xi32>
      %147 = vector.broadcast %130 : vector<8x1xi1> to vector<8x128xi1>
      %148 = arith.andi %147, %146 : vector<8x128xi1>
      %cst_47 = arith.constant 0xFF800000 : f32
      %149 = vector.broadcast %cst_47 : f32 to vector<8x128xf32>
      %150 = arith.select %148, %149, %100 : vector<8x128xi1>, vector<8x128xf32>
      %cst_48 = arith.constant dense<true> : vector<8x1xi1>
      %151 = arith.xori %130, %cst_48 : vector<8x1xi1>
      %152 = vector.broadcast %123 : vector<8x1xi32> to vector<8x4xi32>
      %153 = arith.cmpi eq, %56, %152 : vector<8x4xi32>
      %154 = vector.broadcast %151 : vector<8x1xi1> to vector<8x4xi1>
      %155 = arith.andi %154, %153 : vector<8x4xi1>
      %cst_49 = arith.constant 0xFF800000 : f32
      %156 = vector.broadcast %cst_49 : f32 to vector<8x4xf32>
      %157 = arith.select %155, %156, %107 : vector<8x4xi1>, vector<8x4xf32>
      %cst_50 = arith.constant dense<0xFF800000> : vector<8xf32>
      %158 = vector.multi_reduction <maximumf>, %150, %cst_50 [1] : vector<8x128xf32> to vector<8xf32>
      %159 = vector.shape_cast %158 : vector<8xf32> to vector<8x1xf32>
      %cst_51 = arith.constant dense<0xFF800000> : vector<8xf32>
      %160 = vector.multi_reduction <maximumf>, %157, %cst_51 [1] : vector<8x4xf32> to vector<8xf32>
      %161 = vector.shape_cast %160 : vector<8xf32> to vector<8x1xf32>
      %162 = vector.broadcast %159 : vector<8x1xf32> to vector<8x128xf32>
      %163 = arith.cmpf oeq, %150, %162 : vector<8x128xf32>
      %c1073741824_i32_52 = arith.constant 1073741824 : i32
      %164 = vector.broadcast %c1073741824_i32_52 : i32 to vector<8x128xi32>
      %165 = arith.select %163, %55, %164 : vector<8x128xi1>, vector<8x128xi32>
      %cst_53 = arith.constant dense<2147483647> : vector<8xi32>
      %166 = vector.multi_reduction <minsi>, %165, %cst_53 [1] : vector<8x128xi32> to vector<8xi32>
      %167 = vector.shape_cast %166 : vector<8xi32> to vector<8x1xi32>
      %168 = vector.broadcast %161 : vector<8x1xf32> to vector<8x4xf32>
      %169 = arith.cmpf oeq, %157, %168 : vector<8x4xf32>
      %c1073741824_i32_54 = arith.constant 1073741824 : i32
      %170 = vector.broadcast %c1073741824_i32_54 : i32 to vector<8x4xi32>
      %171 = arith.select %169, %56, %170 : vector<8x4xi1>, vector<8x4xi32>
      %cst_55 = arith.constant dense<2147483647> : vector<8xi32>
      %172 = vector.multi_reduction <minsi>, %171, %cst_55 [1] : vector<8x4xi32> to vector<8xi32>
      %173 = vector.shape_cast %172 : vector<8xi32> to vector<8x1xi32>
      %174 = vector.broadcast %173 : vector<8x1xi32> to vector<8x4xi32>
      %175 = arith.cmpi eq, %56, %174 : vector<8x4xi32>
      %c0_i32_56 = arith.constant 0 : i32
      %176 = vector.broadcast %c0_i32_56 : i32 to vector<8x4xi32>
      %177 = arith.select %175, %54, %176 : vector<8x4xi1>, vector<8x4xi32>
      %cst_57 = arith.constant dense<0> : vector<8xi32>
      %178 = vector.multi_reduction <add>, %177, %cst_57 [1] : vector<8x4xi32> to vector<8xi32>
      %179 = vector.shape_cast %178 : vector<8xi32> to vector<8x1xi32>
      %180 = arith.cmpf ogt, %159, %161 : vector<8x1xf32>
      %181 = arith.maximumf %159, %161 : vector<8x1xf32>
      %182 = vector.broadcast %57 : i32 to vector<8x1xi32>
      %183 = arith.addi %167, %182 : vector<8x1xi32>
      %184 = arith.select %180, %183, %179 : vector<8x1xi1>, vector<8x1xi32>
      %c2_i32 = arith.constant 2 : i32
      %185 = vector.broadcast %c2_i32 : i32 to vector<8x4xi32>
      %186 = arith.cmpi eq, %56, %185 : vector<8x4xi32>
      %187 = vector.shape_cast %181 : vector<8x1xf32> to vector<8x1xf32>
      %188 = vector.broadcast %187 : vector<8x1xf32> to vector<8x4xf32>
      %189 = arith.select %186, %188, %139 : vector<8x4xi1>, vector<8x4xf32>
      %c2_i32_58 = arith.constant 2 : i32
      %190 = vector.broadcast %c2_i32_58 : i32 to vector<8x4xi32>
      %191 = arith.cmpi eq, %56, %190 : vector<8x4xi32>
      %192 = vector.shape_cast %184 : vector<8x1xi32> to vector<8x1xi32>
      %193 = vector.broadcast %192 : vector<8x1xi32> to vector<8x4xi32>
      %194 = arith.select %191, %193, %144 : vector<8x4xi1>, vector<8x4xi32>
      %195 = vector.broadcast %167 : vector<8x1xi32> to vector<8x128xi32>
      %196 = arith.cmpi eq, %55, %195 : vector<8x128xi32>
      %197 = vector.broadcast %180 : vector<8x1xi1> to vector<8x128xi1>
      %198 = arith.andi %197, %196 : vector<8x128xi1>
      %cst_59 = arith.constant 0xFF800000 : f32
      %199 = vector.broadcast %cst_59 : f32 to vector<8x128xf32>
      %200 = arith.select %198, %199, %150 : vector<8x128xi1>, vector<8x128xf32>
      %cst_60 = arith.constant dense<true> : vector<8x1xi1>
      %201 = arith.xori %180, %cst_60 : vector<8x1xi1>
      %202 = vector.broadcast %173 : vector<8x1xi32> to vector<8x4xi32>
      %203 = arith.cmpi eq, %56, %202 : vector<8x4xi32>
      %204 = vector.broadcast %201 : vector<8x1xi1> to vector<8x4xi1>
      %205 = arith.andi %204, %203 : vector<8x4xi1>
      %cst_61 = arith.constant 0xFF800000 : f32
      %206 = vector.broadcast %cst_61 : f32 to vector<8x4xf32>
      %207 = arith.select %205, %206, %157 : vector<8x4xi1>, vector<8x4xf32>
      %cst_62 = arith.constant dense<0xFF800000> : vector<8xf32>
      %208 = vector.multi_reduction <maximumf>, %200, %cst_62 [1] : vector<8x128xf32> to vector<8xf32>
      %209 = vector.shape_cast %208 : vector<8xf32> to vector<8x1xf32>
      %cst_63 = arith.constant dense<0xFF800000> : vector<8xf32>
      %210 = vector.multi_reduction <maximumf>, %207, %cst_63 [1] : vector<8x4xf32> to vector<8xf32>
      %211 = vector.shape_cast %210 : vector<8xf32> to vector<8x1xf32>
      %212 = vector.broadcast %209 : vector<8x1xf32> to vector<8x128xf32>
      %213 = arith.cmpf oeq, %200, %212 : vector<8x128xf32>
      %c1073741824_i32_64 = arith.constant 1073741824 : i32
      %214 = vector.broadcast %c1073741824_i32_64 : i32 to vector<8x128xi32>
      %215 = arith.select %213, %55, %214 : vector<8x128xi1>, vector<8x128xi32>
      %cst_65 = arith.constant dense<2147483647> : vector<8xi32>
      %216 = vector.multi_reduction <minsi>, %215, %cst_65 [1] : vector<8x128xi32> to vector<8xi32>
      %217 = vector.shape_cast %216 : vector<8xi32> to vector<8x1xi32>
      %218 = vector.broadcast %211 : vector<8x1xf32> to vector<8x4xf32>
      %219 = arith.cmpf oeq, %207, %218 : vector<8x4xf32>
      %c1073741824_i32_66 = arith.constant 1073741824 : i32
      %220 = vector.broadcast %c1073741824_i32_66 : i32 to vector<8x4xi32>
      %221 = arith.select %219, %56, %220 : vector<8x4xi1>, vector<8x4xi32>
      %cst_67 = arith.constant dense<2147483647> : vector<8xi32>
      %222 = vector.multi_reduction <minsi>, %221, %cst_67 [1] : vector<8x4xi32> to vector<8xi32>
      %223 = vector.shape_cast %222 : vector<8xi32> to vector<8x1xi32>
      %224 = vector.broadcast %223 : vector<8x1xi32> to vector<8x4xi32>
      %225 = arith.cmpi eq, %56, %224 : vector<8x4xi32>
      %c0_i32_68 = arith.constant 0 : i32
      %226 = vector.broadcast %c0_i32_68 : i32 to vector<8x4xi32>
      %227 = arith.select %225, %54, %226 : vector<8x4xi1>, vector<8x4xi32>
      %cst_69 = arith.constant dense<0> : vector<8xi32>
      %228 = vector.multi_reduction <add>, %227, %cst_69 [1] : vector<8x4xi32> to vector<8xi32>
      %229 = vector.shape_cast %228 : vector<8xi32> to vector<8x1xi32>
      %230 = arith.cmpf ogt, %209, %211 : vector<8x1xf32>
      %231 = arith.maximumf %209, %211 : vector<8x1xf32>
      %232 = vector.broadcast %57 : i32 to vector<8x1xi32>
      %233 = arith.addi %217, %232 : vector<8x1xi32>
      %234 = arith.select %230, %233, %229 : vector<8x1xi1>, vector<8x1xi32>
      %c3_i32 = arith.constant 3 : i32
      %235 = vector.broadcast %c3_i32 : i32 to vector<8x4xi32>
      %236 = arith.cmpi eq, %56, %235 : vector<8x4xi32>
      %237 = vector.shape_cast %231 : vector<8x1xf32> to vector<8x1xf32>
      %238 = vector.broadcast %237 : vector<8x1xf32> to vector<8x4xf32>
      %239 = arith.select %236, %238, %189 : vector<8x4xi1>, vector<8x4xf32>
      %c3_i32_70 = arith.constant 3 : i32
      %240 = vector.broadcast %c3_i32_70 : i32 to vector<8x4xi32>
      %241 = arith.cmpi eq, %56, %240 : vector<8x4xi32>
      %242 = vector.shape_cast %234 : vector<8x1xi32> to vector<8x1xi32>
      %243 = vector.broadcast %242 : vector<8x1xi32> to vector<8x4xi32>
      %244 = arith.select %241, %243, %194 : vector<8x4xi1>, vector<8x4xi32>
      %c0_71 = arith.constant 0 : index
      %c0_72 = arith.constant 0 : index
      %245 = vector.load %arg8[%c0_71, %c0_72] : memref<8x4xf32, #tpu.memory_space<vmem>>, vector<8x4xf32>
      tpu.vector_store %arg8[%c0_71, %c0_72], %239 {strides = array<i32>} : memref<8x4xf32, #tpu.memory_space<vmem>>, vector<8x4xf32>,
      %c0_73 = arith.constant 0 : index
      %c0_74 = arith.constant 0 : index
      %246 = vector.load %arg9[%c0_73, %c0_74] : memref<8x4xi32, #tpu.memory_space<vmem>>, vector<8x4xi32>
      tpu.vector_store %arg9[%c0_73, %c0_74], %244 {strides = array<i32>} : memref<8x4xi32, #tpu.memory_space<vmem>>, vector<8x4xi32>,
    } else {
    }
    %c0_i32_20 = arith.constant 0 : i32
    %51 = arith.cmpi eq, %arg2, %c0_i32_20 : i32
    %52 = arith.extui %51 : i1 to i32
    %c0_i32_21 = arith.constant 0 : i32
    %53 = arith.cmpi ne, %52, %c0_i32_21 : i32
    scf.if %53 {
      %c0_22 = arith.constant 0 : index
      %c0_23 = arith.constant 0 : index
      %54 = vector.load %arg9[%c0_22, %c0_23] : memref<8x4xi32, #tpu.memory_space<vmem>>, vector<8x4xi32>
      %c0_24 = arith.constant 0 : index
      %c0_25 = arith.constant 0 : index
      %c0_26 = arith.constant 0 : index
      %55 = vector.load %arg7[%c0_24, %c0_25, %c0_26] : memref<1x8x4xi32, #tpu.memory_space<vmem>>, vector<1x8x4xi32>
      %56 = vector.shape_cast %55 : vector<1x8x4xi32> to vector<8x4xi32>
      %57 = vector.shape_cast %54 : vector<8x4xi32> to vector<1x8x4xi32>
      tpu.vector_store %arg7[%c0_24, %c0_25, %c0_26], %57 {strides = array<i32>} : memref<1x8x4xi32, #tpu.memory_space<vmem>>, vector<1x8x4xi32>,
    } else {
    }
    return
  }
  func.func @transform_0(%arg0: i32, %arg1: i32, %arg2: i32) -> (i32, i32, i32) {
    %c0_i32 = arith.constant 0 : i32
    %c0_i32_0 = arith.constant 0 : i32
    return %arg0, %c0_i32, %arg2 : i32, i32, i32
  }
  func.func @transform_1(%arg0: i32, %arg1: i32, %arg2: i32) -> (i32, i32, i32) {
    %c0_i32 = arith.constant 0 : i32
    %c0_i32_0 = arith.constant 0 : i32
    return %arg0, %arg1, %c0_i32 : i32, i32, i32
  }
  func.func @transform_2(%arg0: i32, %arg1: i32, %arg2: i32) -> (i32, i32, i32) {
    %c0_i32 = arith.constant 0 : i32
    %c0_i32_0 = arith.constant 0 : i32
    return %arg0, %c0_i32, %arg2 : i32, i32, i32
  }
  func.func @transform_3(%arg0: i32, %arg1: i32, %arg2: i32) -> (i32, i32, i32) {
    %c0_i32 = arith.constant 0 : i32
    %c0_i32_0 = arith.constant 0 : i32
    return %arg0, %arg1, %c0_i32 : i32, i32, i32
  }
  func.func @transform_4(%arg0: i32, %arg1: i32, %arg2: i32) -> (i32, i32, i32) {
    %c0_i32 = arith.constant 0 : i32
    %c0_i32_0 = arith.constant 0 : i32
    return %arg0, %arg1, %c0_i32 : i32, i32, i32
  }
}

</mosaic_0001>

<llo_original>
// kernel: tpu_custom_call.1
$region0: #{tpu_custom_call.1}
  #allocation0 [shape = 'u32[]', space=smem, size = 0x4, offset = 0x4, fixed_abs, tag = 'smem constant byte address 0x4 - core index']
  #allocation1 [shape = 'u32[72,128]{1,0:T(1,128)}', space=vmem, size = 0x9000, scoped, tag = 'internal scratch']
  #allocation2 [shape = 'f32[8,4]{1,0:T(8,128)}', space=vmem, size = 0x1000, scoped, tag = 'scratch operand']
  #allocation3 [shape = 's32[8,4]{1,0:T(8,128)}', space=vmem, size = 0x1000, scoped, tag = 'scratch operand']
  %s0 = inlined_call_operand.vmem [shape: f32[2,3,128], index: 0, kind: input, shape index: {}]
  %s1 = inlined_call_operand.vmem [shape: f32[2,8,3], index: 1, kind: input, shape index: {}]
  %s2 = inlined_call_operand.vmem [shape: f32[2,1,128], index: 2, kind: input, shape index: {}]
  %s3 = inlined_call_operand.vmem [shape: f32[2,8,1], index: 3, kind: input, shape index: {}]
  %s4 = inlined_call_operand.vmem [shape: s32[2,8,4], index: 4, kind: output, shape index: {}]
  %s5 = sld [smem:[#allocation0]]
  $region61: #{tpu_custom_call.1} parent=0
    _
  %s7 = ssub.s32 1, %s5
  %s8 = scalar_select 0, %s7, %s5
  loop: start=0, step=1, limit=4
  $region2: #{tpu_custom_call.1} parent=0 // loop_pre_header
    _
  $region3: #{tpu_custom_call.1} parent=0 // loop_header
    %s10 = sphi 0, %s14
    %p11 = scmp.ge.s32.totalorder %s10, 4
    %s17 = sphi 0, %s36
    %s18 = sphi 0, %s32
    %s19 = sphi 0, %s28
    %s20 = sphi 0, %s17
    %s21 = sphi 0, %s18
    %s22 = sphi 0, %s19
    %s23 = sphi 0, %s20
    %s24 = sphi 0, %s21
    %s25 = sphi 0, %s22
    %s41 = sphi 0, %s43
    %s44 = sphi 0, %s41
    %s45 = sphi 0, %s44
    %s61 = sphi 0, %s45
    %s69 = sphi 0, %s71
    %s72 = sphi 0, %s69
    %s73 = sphi 0, %s72
    %s89 = sphi 0, %s73
    %s97 = sphi 0, %s99
    %s100 = sphi 0, %s97
    %s101 = sphi 0, %s100
    %s117 = sphi 0, %s101
    %s125 = sphi 0, %s127
    %s128 = sphi 0, %s125
    %s129 = sphi 0, %s128
    %s145 = sphi 0, %s129
    %s153 = sphi 0, %s155
    %s156 = sphi 0, %s153
    %s157 = sphi 0, %s156
    %s173 = sphi 0, %s157
  $region4: #{tpu_custom_call.1} parent=0 // loop_header_branch
    %13 = sbr.rel (%p11) target = $region8
  $region5: #{tpu_custom_call.1} parent=0 // loop_body
    %s15 = ssub.s32 %s10, 1
    %s16 = ssub.s32 %s10, 2
    %s26 = sadd.s32 1, %s19
    %p27 = scmp.ge.s32.totalorder %s26, 1
    %s28 = scalar_select %p27, 0, %s26
    %s29 = sadd.s32 1, %s18
    %s30 = scalar_select %p27, %s29, %s18
    %p31 = scmp.ge.s32.totalorder %s30, 1
    %s32 = scalar_select %p31, 0, %s30
    %s33 = sadd.s32 1, %s17
    %s34 = scalar_select %p31, %s33, %s17
    %p35 = scmp.ge.s32.totalorder %s34, 2
    %s36 = scalar_select %p35, 0, %s34
    %s37 = ssub.s32 %s17, %s36
    %s38 = ssub.s32 %s19, %s28
    %s39 = sor.u32 %s37, %s38
    %p40 = scmp.eq.s32.totalorder %s39, 0
    %s42 = sadd.s32 %s41, 1
    %s43 = scalar_select %p40, %s41, %s42
    %p46 = pneg %p40
    %p47 = scmp.eq.s32.totalorder %s10, 1
    %p48 = por %p46, %p47
    %p49 = scmp.ne.s32.totalorder %s41, %s44
    %p50 = scmp.eq.s32.totalorder %s10, 0
    %p51 = por %p49, %p50
    %p52 = scmp.ne.s32.totalorder %s41, %s44
    %p53 = scmp.eq.s32.totalorder %s15, 1
    %p54 = por %p52, %p53
    %p55 = scmp.ne.s32.totalorder %s44, %s45
    %p56 = scmp.eq.s32.totalorder %s15, 0
    %p57 = por %p55, %p56
    %p58 = scmp.ne.s32.totalorder %s44, %s45
    %p59 = scmp.eq.s32.totalorder %s16, 1
    %p60 = por %p58, %p59
    %p62 = scmp.ne.s32.totalorder %s45, %s61
    %p63 = scmp.eq.s32.totalorder %s16, 0
    %p64 = por %p62, %p63
    %s65 = ssub.s32 %s17, %s36
    %s66 = ssub.s32 %s18, %s32
    %s67 = sor.u32 %s65, %s66
    %p68 = scmp.eq.s32.totalorder %s67, 0
    %s70 = sadd.s32 %s69, 1
    %s71 = scalar_select %p68, %s69, %s70
    %p74 = pneg %p68
    %p75 = scmp.eq.s32.totalorder %s10, 1
    %p76 = por %p74, %p75
    %p77 = scmp.ne.s32.totalorder %s69, %s72
    %p78 = scmp.eq.s32.totalorder %s10, 0
    %p79 = por %p77, %p78
    %p80 = scmp.ne.s32.totalorder %s69, %s72
    %p81 = scmp.eq.s32.totalorder %s15, 1
    %p82 = por %p80, %p81
    %p83 = scmp.ne.s32.totalorder %s72, %s73
    %p84 = scmp.eq.s32.totalorder %s15, 0
    %p85 = por %p83, %p84
    %p86 = scmp.ne.s32.totalorder %s72, %s73
    %p87 = scmp.eq.s32.totalorder %s16, 1
    %p88 = por %p86, %p87
    %p90 = scmp.ne.s32.totalorder %s73, %s89
    %p91 = scmp.eq.s32.totalorder %s16, 0
    %p92 = por %p90, %p91
    %s93 = ssub.s32 %s17, %s36
    %s94 = ssub.s32 %s19, %s28
    %s95 = sor.u32 %s93, %s94
    %p96 = scmp.eq.s32.totalorder %s95, 0
    %s98 = sadd.s32 %s97, 1
    %s99 = scalar_select %p96, %s97, %s98
    %p102 = pneg %p96
    %p103 = scmp.eq.s32.totalorder %s10, 1
    %p104 = por %p102, %p103
    %p105 = scmp.ne.s32.totalorder %s97, %s100
    %p106 = scmp.eq.s32.totalorder %s10, 0
    %p107 = por %p105, %p106
    %p108 = scmp.ne.s32.totalorder %s97, %s100
    %p109 = scmp.eq.s32.totalorder %s15, 1
    %p110 = por %p108, %p109
    %p111 = scmp.ne.s32.totalorder %s100, %s101
    %p112 = scmp.eq.s32.totalorder %s15, 0
    %p113 = por %p111, %p112
    %p114 = scmp.ne.s32.totalorder %s100, %s101
    %p115 = scmp.eq.s32.totalorder %s16, 1
    %p116 = por %p114, %p115
    %p118 = scmp.ne.s32.totalorder %s101, %s117
    %p119 = scmp.eq.s32.totalorder %s16, 0
    %p120 = por %p118, %p119
    %s121 = ssub.s32 %s17, %s36
    %s122 = ssub.s32 %s18, %s32
    %s123 = sor.u32 %s121, %s122
    %p124 = scmp.eq.s32.totalorder %s123, 0
    %s126 = sadd.s32 %s125, 1
    %s127 = scalar_select %p124, %s125, %s126
    %p130 = pneg %p124
    %p131 = scmp.eq.s32.totalorder %s10, 1
    %p132 = por %p130, %p131
    %p133 = scmp.ne.s32.totalorder %s125, %s128
    %p134 = scmp.eq.s32.totalorder %s10, 0
    %p135 = por %p133, %p134
    %p136 = scmp.ne.s32.totalorder %s125, %s128
    %p137 = scmp.eq.s32.totalorder %s15, 1
    %p138 = por %p136, %p137
    %p139 = scmp.ne.s32.totalorder %s128, %s129
    %p140 = scmp.eq.s32.totalorder %s15, 0
    %p141 = por %p139, %p140
    %p142 = scmp.ne.s32.totalorder %s128, %s129
    %p143 = scmp.eq.s32.totalorder %s16, 1
    %p144 = por %p142, %p143
    %p146 = scmp.ne.s32.totalorder %s129, %s145
    %p147 = scmp.eq.s32.totalorder %s16, 0
    %p148 = por %p146, %p147
    %s149 = ssub.s32 %s17, %s36
    %s150 = ssub.s32 %s18, %s32
    %s151 = sor.u32 %s149, %s150
    %p152 = scmp.eq.s32.totalorder %s151, 0
    %s154 = sadd.s32 %s153, 1
    %s155 = scalar_select %p152, %s153, %s154
    %p158 = pneg %p152
    %p159 = scmp.eq.s32.totalorder %s10, 1
    %p160 = por %p158, %p159
    %p161 = scmp.ne.s32.totalorder %s153, %s156
    %p162 = scmp.eq.s32.totalorder %s10, 0
    %p163 = por %p161, %p162
    %p164 = scmp.ne.s32.totalorder %s153, %s156
    %p165 = scmp.eq.s32.totalorder %s15, 1
    %p166 = por %p164, %p165
    %p167 = scmp.ne.s32.totalorder %s156, %s157
    %p168 = scmp.eq.s32.totalorder %s15, 0
    %p169 = por %p167, %p168
    %p170 = scmp.ne.s32.totalorder %s156, %s157
    %p171 = scmp.eq.s32.totalorder %s16, 1
    %p172 = por %p170, %p171
    %p174 = scmp.ne.s32.totalorder %s157, %s173
    %p175 = scmp.eq.s32.totalorder %s16, 0
    %p176 = por %p174, %p175
    %p177 = scmp.le.s32.totalorder 1, %s10
    %p178 = scmp.lt.s32.totalorder %s10, 3
    %p179 = pnand %p177, %p178
    %p180 = pneg %p179
    // Predicated region
    $region9: #{tpu_custom_call.1} parent=5 // pred_check
      _
    $region10: #{tpu_custom_call.1} parent=5 // pred_check_branch
      %182 = sbr.rel (%p179) target = $region12
    $region11: #{tpu_custom_call.1} parent=5 // pred_region
      %s183 = ssub.s32 %s10, 1
    $region12: #{tpu_custom_call.1} parent=5 // pred_fallthru
      _
    %p184 = scmp.lt.s32.totalorder %s10, 2
    // Predicated region
    $region13: #{tpu_custom_call.1} parent=5 // pred_check
      %p185 = pneg %p184
    $region14: #{tpu_custom_call.1} parent=5 // pred_check_branch
      %187 = sbr.rel (%p185) target = $region16
    $region15: #{tpu_custom_call.1} parent=5 // pred_region
      // Predicated region
      $region17: #{tpu_custom_call.1} parent=15 // pred_check
        %p188 = pneg %p51
      $region18: #{tpu_custom_call.1} parent=15 // pred_check_branch
        %190 = sbr.rel (%p188) target = $region20
      $region19: #{tpu_custom_call.1} parent=15 // pred_region
        %p191 = scmp.lt.s32.totalorder %s17, 1
        %s192 = scalar_select %p191, %s17, 1
        %p193 = scmp.lt.s32.totalorder %s19, 0
        %s194 = scalar_select %p193, %s19, 0
        %s195 = sadd.s32 %s194, %s192
        %s196 = smul.addr %s195, 4
        %s197 = scalar_lea.vmem %s0, %s196
      $region20: #{tpu_custom_call.1} parent=15 // pred_fallthru
        _
      // Predicated region
      $region21: #{tpu_custom_call.1} parent=15 // pred_check
        %p198 = pneg %p79
      $region22: #{tpu_custom_call.1} parent=15 // pred_check_branch
        %200 = sbr.rel (%p198) target = $region24
      $region23: #{tpu_custom_call.1} parent=15 // pred_region
        %p201 = scmp.lt.s32.totalorder %s17, 1
        %s202 = scalar_select %p201, %s17, 1
        %p203 = scmp.lt.s32.totalorder %s18, 0
        %s204 = scalar_select %p203, %s18, 0
        %s205 = sadd.s32 %s204, %s202
        %s206 = smul.addr %s205, 8
        %s207 = scalar_lea.vmem %s1, %s206
      $region24: #{tpu_custom_call.1} parent=15 // pred_fallthru
        _
      // Predicated region
      $region25: #{tpu_custom_call.1} parent=15 // pred_check
        %p208 = pneg %p107
      $region26: #{tpu_custom_call.1} parent=15 // pred_check_branch
        %210 = sbr.rel (%p208) target = $region28
      $region27: #{tpu_custom_call.1} parent=15 // pred_region
        %p211 = scmp.lt.s32.totalorder %s17, 1
        %s212 = scalar_select %p211, %s17, 1
        %p213 = scmp.lt.s32.totalorder %s19, 0
        %s214 = scalar_select %p213, %s19, 0
        %s215 = sadd.s32 %s214, %s212
        %s216 = scalar_lea.vmem %s2, %s215
      $region28: #{tpu_custom_call.1} parent=15 // pred_fallthru
        _
      // Predicated region
      $region29: #{tpu_custom_call.1} parent=15 // pred_check
        %p217 = pneg %p135
      $region30: #{tpu_custom_call.1} parent=15 // pred_check_branch
        %219 = sbr.rel (%p217) target = $region32
      $region31: #{tpu_custom_call.1} parent=15 // pred_region
        %p220 = scmp.lt.s32.totalorder %s17, 1
        %s221 = scalar_select %p220, %s17, 1
        %p222 = scmp.lt.s32.totalorder %s18, 0
        %s223 = scalar_select %p222, %s18, 0
        %s224 = sadd.s32 %s223, %s221
        %s225 = smul.addr %s224, 8
        %s226 = scalar_lea.vmem %s3, %s225
      $region32: #{tpu_custom_call.1} parent=15 // pred_fallthru
        _
    $region16: #{tpu_custom_call.1} parent=5 // pred_fallthru
      _
    %p227 = scmp.le.s32.totalorder 1, %s10
    %p228 = scmp.lt.s32.totalorder %s10, 3
    %p229 = pnand %p227, %p228
    %p230 = pneg %p229
    // Predicated region
    $region33: #{tpu_custom_call.1} parent=5 // pred_check
      _
    $region34: #{tpu_custom_call.1} parent=5 // pred_check_branch
      %232 = sbr.rel (%p229) target = $region36
    $region35: #{tpu_custom_call.1} parent=5 // pred_region
      %s233 = ssub.s32 %s10, 1
      %p234 = scmp.lt.s32.totalorder %s20, 1
      %s235 = scalar_select %p234, %s20, 1
      %p236 = scmp.lt.s32.totalorder %s22, 0
      %s237 = scalar_select %p236, %s22, 0
      %s238 = sadd.s32 %s237, %s235
      %s239 = smul.addr %s238, 4
      %s240 = scalar_lea.vmem %s0, %s239
      %p241 = pneg %p57
      %p242 = pneg %p54
      %p243 = scmp.lt.s32.totalorder %s20, 1
      %s244 = scalar_select %p243, %s20, 1
      %p245 = scmp.lt.s32.totalorder %s21, 0
      %s246 = scalar_select %p245, %s21, 0
      %s247 = sadd.s32 %s246, %s244
      %s248 = smul.addr %s247, 8
      %s249 = scalar_lea.vmem %s1, %s248
      %p250 = pneg %p85
      %p251 = pneg %p82
      %p252 = scmp.lt.s32.totalorder %s20, 1
      %s253 = scalar_select %p252, %s20, 1
      %p254 = scmp.lt.s32.totalorder %s22, 0
      %s255 = scalar_select %p254, %s22, 0
      %s256 = sadd.s32 %s255, %s253
      %s257 = scalar_lea.vmem %s2, %s256
      %p258 = pneg %p113
      %p259 = pneg %p110
      %p260 = scmp.lt.s32.totalorder %s20, 1
      %s261 = scalar_select %p260, %s20, 1
      %p262 = scmp.lt.s32.totalorder %s21, 0
      %s263 = scalar_select %p262, %s21, 0
      %s264 = sadd.s32 %s263, %s261
      %s265 = smul.addr %s264, 8
      %s266 = scalar_lea.vmem %s3, %s265
      %p267 = pneg %p141
      %p268 = pneg %p138
      %p269 = pneg %p169
      %p270 = pneg %p166
      %p271 = scmp.lt.s32.totalorder %s20, 1
      %s272 = scalar_select %p271, %s20, 1
      %p273 = scmp.lt.s32.totalorder %s21, 0
      %s274 = scalar_select %p273, %s21, 0
      %s275 = sadd.s32 %s274, %s272
      %s276 = smul.addr %s275, 8
      %s277 = scalar_lea.vmem %s4, %s276
      %p278 = scmp.lt.s32.totalorder %s20, 1
      %s279 = scalar_select %p278, %s20, 1
      %p280 = scmp.lt.s32.totalorder %s22, 0
      %s281 = scalar_select %p280, %s22, 0
      %s282 = sadd.s32 %s281, %s279
      %s283 = smul.addr %s282, 4
      %s284 = scalar_lea.vmem %s0, %s283
      %p285 = scmp.lt.s32.totalorder %s20, 1
      %s286 = scalar_select %p285, %s20, 1
      %p287 = scmp.lt.s32.totalorder %s21, 0
      %s288 = scalar_select %p287, %s21, 0
      %s289 = sadd.s32 %s288, %s286
      %s290 = smul.addr %s289, 8
      %s291 = scalar_lea.vmem %s1, %s290
      %p292 = scmp.lt.s32.totalorder %s20, 1
      %s293 = scalar_select %p292, %s20, 1
      %p294 = scmp.lt.s32.totalorder %s22, 0
      %s295 = scalar_select %p294, %s22, 0
      %s296 = sadd.s32 %s295, %s293
      %s297 = scalar_lea.vmem %s2, %s296
      %p298 = scmp.lt.s32.totalorder %s20, 1
      %s299 = scalar_select %p298, %s20, 1
      %p300 = scmp.lt.s32.totalorder %s21, 0
      %s301 = scalar_select %p300, %s21, 0
      %s302 = sadd.s32 %s301, %s299
      %s303 = smul.addr %s302, 8
      %s304 = scalar_lea.vmem %s3, %s303
      %p305 = scmp.lt.s32.totalorder %s20, 1
      %s306 = scalar_select %p305, %s20, 1
      %p307 = scmp.lt.s32.totalorder %s21, 0
      %s308 = scalar_select %p307, %s21, 0
      %s309 = sadd.s32 %s308, %s306
      %s310 = smul.addr %s309, 8
      %s311 = scalar_lea.vmem %s4, %s310
      %p312 = scmp.eq.s32.totalorder %s22, 0
      // Predicated region
      $region37: #{tpu_custom_call.1} parent=35 // pred_check
        %p313 = pneg %p312
      $region38: #{tpu_custom_call.1} parent=35 // pred_check_branch
        %315 = sbr.rel (%p313) target = $region40
      $region39: #{tpu_custom_call.1} parent=35 // pred_region
        %vm316 = vcmask 31744
        %317 = vst.msk [vmem:[#allocation2] sm:$0xff] %vm316, -inf
        %318 = vst.msk [vmem:[#allocation3] sm:$0xff] %vm316, 0
      $region40: #{tpu_custom_call.1} parent=35 // pred_fallthru
        _
      %v319 = vld [vmem:[%s284] sm:$0x7]
      %v320 = vld [vmem:[%s291] sm:$0xff]
      %v321 = vld [vmem:[%s297] sm:$0x1]
      %v322 = vld [vmem:[%s304] sm:$0xff]
      %324 = vset.pattern.permute.xlu0 0
      %325 = vperm.xlu0 %324, %v320
      %v326 = vpop.permute.xlu0 %325
      %v328 = vperm.slane %v319, 0
      %v329 = vmul.f32 %v326, %v328
      %330 = vset.pattern.permute.xlu0 1
      %331 = vperm.xlu0 %330, %v320
      %v332 = vpop.permute.xlu0 %331
      %v334 = vperm.slane %v319, 1
      %v335 = vmul.f32 %v332, %v334
      %v336 = vadd.f32 %v329, %v335
      %337 = vset.pattern.permute.xlu0 2
      %338 = vperm.xlu0 %337, %v320
      %v339 = vpop.permute.xlu0 %338
      %v341 = vperm.slane %v319, 2
      %v342 = vmul.f32 %v339, %v341
      %v343 = vadd.f32 %v336, %v342
      %v344 = vmul.f32 %v343, 2.0
      %346 = vset.pattern.permute.xlu0 0
      %347 = vperm.xlu0 %346, %v322
      %v348 = vpop.permute.xlu0 %347
      %v350 = vsub.f32 %v344, %v348
      %v352 = vperm.slane %v321, 0
      %v354 = vsub.f32 %v350, %v352
      %355 = vmax.xlane.f32.xlu0 %v354
      %v356 = vpop.xlane.xlu0 %355
      %v357 = vld [vmem:[#allocation2] sm:$0xff]
      %vm358 = vcmp.gt.f32.partialorder %v356, %v357
      %v359 = vsel %vm358, 1, 0
      %vm360 = vcmask 31768
      %v361 = vsel %vm360, %v359, 2147483648
      %v362 = vand.u32 %v361, 65535
      %v363 = vshra.s32 %v361, 16
      %v364 = vcvt.s32.f32 %v362
      %v365 = vcvt.s32.f32 %v363
      %366 = vmax.xlane.f32.xlu0 %v365
      %v367 = vpop.xlane.xlu0 %366
      %vm368 = vcmp.eq.f32.partialorder %v365, %v367
      %v369 = vsel %vm368, %v364, -inf
      %370 = vmax.xlane.f32.xlu0 %v369
      %v371 = vpop.xlane.xlu0 %370
      %v372 = vcvt.f32.s32 %v371
      %v373 = vcvt.f32.s32 %v367
      %v374 = vshll.u32 %v373, 16
      %v375 = vadd.s32 %v374, %v372
      %v376 = vrot.slane %v375, 4
      %vm377 = vcmp.gt.s32.totalorder %v375, %v376
      %v378 = vsel %vm377, %v375, %v376
      %v379 = vrot.slane %v378, 2
      %vm380 = vcmp.gt.s32.totalorder %v378, %v379
      %v381 = vsel %vm380, %v378, %v379
      %v382 = vrot.slane %v381, 1
      %vm383 = vcmp.gt.s32.totalorder %v381, %v382
      %v384 = vsel %vm383, %v381, %v382
      %s385 = vtos %v384
      %p386 = scmp.gt.s32.totalorder %s385, 0
      %p387 = por %p312, %p386
      // Predicated region
      $region41: #{tpu_custom_call.1} parent=35 // pred_check
        %p388 = pneg %p387
      $region42: #{tpu_custom_call.1} parent=35 // pred_check_branch
        %390 = sbr.rel (%p388) target = $region44
      $region43: #{tpu_custom_call.1} parent=35 // pred_region
        %v391 = vld [vmem:[#allocation3] sm:$0xff]
        %v392 = vlaneseq
        %v393 = vand.u32 %v392, 127
        %s394 = smul.u32 %s22, 128
        %vm395 = vcmask 31744
        %v396 = vsel %vm395, %v357, -inf
        %397 = vmax.xlane.f32.xlu0 %v396
        %v398 = vpop.xlane.xlu0 %397
        %vm399 = vcmp.eq.f32.partialorder %v354, %v356
        %v400 = vsel %vm399, %v393, 1073741824
        %v401 = vand.u32 %v400, 65535
        %v402 = vshra.s32 %v400, 16
        %v403 = vcvt.s32.f32 %v401
        %v404 = vcvt.s32.f32 %v402
        %405 = vmin.xlane.f32.xlu0 %v404
        %v406 = vpop.xlane.xlu0 %405
        %vm407 = vcmp.eq.f32.partialorder %v404, %v406
        %v408 = vsel %vm407, %v403, inf
        %409 = vmin.xlane.f32.xlu0 %v408
        %v410 = vpop.xlane.xlu0 %409
        %v411 = vcvt.f32.s32 %v410
        %v412 = vcvt.f32.s32 %v406
        %v413 = vshll.u32 %v412, 16
        %v414 = vadd.s32 %v413, %v411
        %vm415 = vcmp.eq.f32.partialorder %v357, %v398
        %v416 = vsel %vm415, %v393, 1073741824
        %v417 = vsel %vm395, %v416, 2147483647
        %v418 = vand.u32 %v417, 65535
        %v419 = vshra.s32 %v417, 16
        %v420 = vcvt.s32.f32 %v418
        %v421 = vcvt.s32.f32 %v419
        %422 = vmin.xlane.f32.xlu0 %v421
        %v423 = vpop.xlane.xlu0 %422
        %vm424 = vcmp.eq.f32.partialorder %v421, %v423
        %v425 = vsel %vm424, %v420, inf
        %426 = vmin.xlane.f32.xlu0 %v425
        %v427 = vpop.xlane.xlu0 %426
        %v428 = vcvt.f32.s32 %v427
        %v429 = vcvt.f32.s32 %v423
        %v430 = vshll.u32 %v429, 16
        %v431 = vadd.s32 %v430, %v428
        %vm432 = vcmp.eq.s32.totalorder %v393, %v431
        %v433 = vsel %vm432, %v391, 0
        %v434 = vsel %vm395, %v433, 0
        %v435 = vand.u32 %v434, 65535
        %v436 = vshrl.u32 %v434, 16
        %v437 = vcvt.s32.f32 %v435
        %v438 = vcvt.s32.f32 %v436
        %439 = vadd.xlane.f32.xlu0 %v437
        %v440 = vpop.xlane.xlu0 %439
        %441 = vadd.xlane.f32.xlu0 %v438
        %v442 = vpop.xlane.xlu0 %441
        %v443 = vcvt.f32.s32 %v440
        %v444 = vcvt.f32.s32 %v442
        %v445 = vshll.u32 %v444, 16
        %v446 = vadd.s32 %v445, %v443
        %vm447 = vcmp.gt.f32.partialorder %v356, %v398
        %v448 = vmax.f32 %v356, %v398
        %v449 = vstv %s394
        %v450 = vadd.s32 %v414, %v449
        %v451 = vsel %vm447, %v450, %v446
        %vm452 = vcmp.eq.s32.totalorder %v393, 0
        %v453 = vsel %vm452, %v448, -inf
        %v454 = vsel %vm452, %v451, 0
        %vm455 = vcmp.eq.s32.totalorder %v393, %v414
        %v456 = vsel %vm447, 1, 0
        %vm457 = vcmp.eq.s32.totalorder %v456, 1
        %vm458 = vmand %vm457, %vm455
        %v459 = vsel %vm458, -inf, %v354
        %vm460 = vmxor %vm447, 1
        %v461 = vsel %vm460, 1, 0
        %vm462 = vcmp.eq.s32.totalorder %v461, 1
        %vm463 = vmand %vm462, %vm432
        %v464 = vsel %vm463, -inf, %v357
        %465 = vmax.xlane.f32.xlu0 %v459
        %v466 = vpop.xlane.xlu0 %465
        %v467 = vsel %vm395, %v464, -inf
        %468 = vmax.xlane.f32.xlu0 %v467
        %v469 = vpop.xlane.xlu0 %468
        %vm470 = vcmp.eq.f32.partialorder %v459, %v466
        %v471 = vsel %vm470, %v393, 1073741824
        %v472 = vand.u32 %v471, 65535
        %v473 = vshra.s32 %v471, 16
        %v474 = vcvt.s32.f32 %v472
        %v475 = vcvt.s32.f32 %v473
        %476 = vmin.xlane.f32.xlu0 %v475
        %v477 = vpop.xlane.xlu0 %476
        %vm478 = vcmp.eq.f32.partialorder %v475, %v477
        %v479 = vsel %vm478, %v474, inf
        %480 = vmin.xlane.f32.xlu0 %v479
        %v481 = vpop.xlane.xlu0 %480
        %v482 = vcvt.f32.s32 %v481
        %v483 = vcvt.f32.s32 %v477
        %v484 = vshll.u32 %v483, 16
        %v485 = vadd.s32 %v484, %v482
        %vm486 = vcmp.eq.f32.partialorder %v464, %v469
        %v487 = vsel %vm486, %v393, 1073741824
        %v488 = vsel %vm395, %v487, 2147483647
        %v489 = vand.u32 %v488, 65535
        %v490 = vshra.s32 %v488, 16
        %v491 = vcvt.s32.f32 %v489
        %v492 = vcvt.s32.f32 %v490
        %493 = vmin.xlane.f32.xlu0 %v492
        %v494 = vpop.xlane.xlu0 %493
        %vm495 = vcmp.eq.f32.partialorder %v492, %v494
        %v496 = vsel %vm495, %v491, inf
        %497 = vmin.xlane.f32.xlu0 %v496
        %v498 = vpop.xlane.xlu0 %497
        %v499 = vcvt.f32.s32 %v498
        %v500 = vcvt.f32.s32 %v494
        %v501 = vshll.u32 %v500, 16
        %v502 = vadd.s32 %v501, %v499
        %vm503 = vcmp.eq.s32.totalorder %v393, %v502
        %v504 = vsel %vm503, %v391, 0
        %v505 = vsel %vm395, %v504, 0
        %v506 = vand.u32 %v505, 65535
        %v507 = vshrl.u32 %v505, 16
        %v508 = vcvt.s32.f32 %v506
        %v509 = vcvt.s32.f32 %v507
        %510 = vadd.xlane.f32.xlu0 %v508
        %v511 = vpop.xlane.xlu0 %510
        %512 = vadd.xlane.f32.xlu0 %v509
        %v513 = vpop.xlane.xlu0 %512
        %v514 = vcvt.f32.s32 %v511
        %v515 = vcvt.f32.s32 %v513
        %v516 = vshll.u32 %v515, 16
        %v517 = vadd.s32 %v516, %v514
        %vm518 = vcmp.gt.f32.partialorder %v466, %v469
        %v519 = vmax.f32 %v466, %v469
        %v520 = vadd.s32 %v485, %v449
        %v521 = vsel %vm518, %v520, %v517
        %vm522 = vcmp.eq.s32.totalorder %v393, 1
        %v523 = vsel %vm522, %v519, %v453
        %v524 = vsel %vm522, %v521, %v454
        %vm525 = vcmp.eq.s32.totalorder %v393, %v485
        %v526 = vsel %vm518, 1, 0
        %vm527 = vcmp.eq.s32.totalorder %v526, 1
        %vm528 = vmand %vm527, %vm525
        %v529 = vsel %vm528, -inf, %v459
        %vm530 = vmxor %vm518, 1
        %v531 = vsel %vm530, 1, 0
        %vm532 = vcmp.eq.s32.totalorder %v531, 1
        %vm533 = vmand %vm532, %vm503
        %v534 = vsel %vm533, -inf, %v464
        %535 = vmax.xlane.f32.xlu0 %v529
        %v536 = vpop.xlane.xlu0 %535
        %v537 = vsel %vm395, %v534, -inf
        %538 = vmax.xlane.f32.xlu0 %v537
        %v539 = vpop.xlane.xlu0 %538
        %vm540 = vcmp.eq.f32.partialorder %v529, %v536
        %v541 = vsel %vm540, %v393, 1073741824
        %v542 = vand.u32 %v541, 65535
        %v543 = vshra.s32 %v541, 16
        %v544 = vcvt.s32.f32 %v542
        %v545 = vcvt.s32.f32 %v543
        %546 = vmin.xlane.f32.xlu0 %v545
        %v547 = vpop.xlane.xlu0 %546
        %vm548 = vcmp.eq.f32.partialorder %v545, %v547
        %v549 = vsel %vm548, %v544, inf
        %550 = vmin.xlane.f32.xlu0 %v549
        %v551 = vpop.xlane.xlu0 %550
        %v552 = vcvt.f32.s32 %v551
        %v553 = vcvt.f32.s32 %v547
        %v554 = vshll.u32 %v553, 16
        %v555 = vadd.s32 %v554, %v552
        %vm556 = vcmp.eq.f32.partialorder %v534, %v539
        %v557 = vsel %vm556, %v393, 1073741824
        %v558 = vsel %vm395, %v557, 2147483647
        %v559 = vand.u32 %v558, 65535
        %v560 = vshra.s32 %v558, 16
        %v561 = vcvt.s32.f32 %v559
        %v562 = vcvt.s32.f32 %v560
        %563 = vmin.xlane.f32.xlu0 %v562
        %v564 = vpop.xlane.xlu0 %563
        %vm565 = vcmp.eq.f32.partialorder %v562, %v564
        %v566 = vsel %vm565, %v561, inf
        %567 = vmin.xlane.f32.xlu0 %v566
        %v568 = vpop.xlane.xlu0 %567
        %v569 = vcvt.f32.s32 %v568
        %v570 = vcvt.f32.s32 %v564
        %v571 = vshll.u32 %v570, 16
        %v572 = vadd.s32 %v571, %v569
        %vm573 = vcmp.eq.s32.totalorder %v393, %v572
        %v574 = vsel %vm573, %v391, 0
        %v575 = vsel %vm395, %v574, 0
        %v576 = vand.u32 %v575, 65535
        %v577 = vshrl.u32 %v575, 16
        %v578 = vcvt.s32.f32 %v576
        %v579 = vcvt.s32.f32 %v577
        %580 = vadd.xlane.f32.xlu0 %v578
        %v581 = vpop.xlane.xlu0 %580
        %582 = vadd.xlane.f32.xlu0 %v579
        %v583 = vpop.xlane.xlu0 %582
        %v584 = vcvt.f32.s32 %v581
        %v585 = vcvt.f32.s32 %v583
        %v586 = vshll.u32 %v585, 16
        %v587 = vadd.s32 %v586, %v584
        %vm588 = vcmp.gt.f32.partialorder %v536, %v539
        %v589 = vmax.f32 %v536, %v539
        %v590 = vadd.s32 %v555, %v449
        %v591 = vsel %vm588, %v590, %v587
        %vm592 = vcmp.eq.s32.totalorder %v393, 2
        %v593 = vsel %vm592, %v589, %v523
        %v594 = vsel %vm592, %v591, %v524
        %vm595 = vcmp.eq.s32.totalorder %v393, %v555
        %v596 = vsel %vm588, 1, 0
        %vm597 = vcmp.eq.s32.totalorder %v596, 1
        %vm598 = vmand %vm597, %vm595
        %v599 = vsel %vm598, -inf, %v529
        %vm600 = vmxor %vm588, 1
        %v601 = vsel %vm600, 1, 0
        %vm602 = vcmp.eq.s32.totalorder %v601, 1
        %vm603 = vmand %vm602, %vm573
        %v604 = vsel %vm603, -inf, %v534
        %605 = vmax.xlane.f32.xlu0 %v599
        %v606 = vpop.xlane.xlu0 %605
        %v607 = vsel %vm395, %v604, -inf
        %608 = vmax.xlane.f32.xlu0 %v607
        %v609 = vpop.xlane.xlu0 %608
        %vm610 = vcmp.eq.f32.partialorder %v599, %v606
        %v611 = vsel %vm610, %v393, 1073741824
        %v612 = vand.u32 %v611, 65535
        %v613 = vshra.s32 %v611, 16
        %v614 = vcvt.s32.f32 %v612
        %v615 = vcvt.s32.f32 %v613
        %616 = vmin.xlane.f32.xlu0 %v615
        %v617 = vpop.xlane.xlu0 %616
        %vm618 = vcmp.eq.f32.partialorder %v615, %v617
        %v619 = vsel %vm618, %v614, inf
        %620 = vmin.xlane.f32.xlu0 %v619
        %v621 = vpop.xlane.xlu0 %620
        %v622 = vcvt.f32.s32 %v621
        %v623 = vcvt.f32.s32 %v617
        %v624 = vshll.u32 %v623, 16
        %v625 = vadd.s32 %v624, %v622
        %vm626 = vcmp.eq.f32.partialorder %v604, %v609
        %v627 = vsel %vm626, %v393, 1073741824
        %v628 = vsel %vm395, %v627, 2147483647
        %v629 = vand.u32 %v628, 65535
        %v630 = vshra.s32 %v628, 16
        %v631 = vcvt.s32.f32 %v629
        %v632 = vcvt.s32.f32 %v630
        %633 = vmin.xlane.f32.xlu0 %v632
        %v634 = vpop.xlane.xlu0 %633
        %vm635 = vcmp.eq.f32.partialorder %v632, %v634
        %v636 = vsel %vm635, %v631, inf
        %637 = vmin.xlane.f32.xlu0 %v636
        %v638 = vpop.xlane.xlu0 %637
        %v639 = vcvt.f32.s32 %v638
        %v640 = vcvt.f32.s32 %v634
        %v641 = vshll.u32 %v640, 16
        %v642 = vadd.s32 %v641, %v639
        %vm643 = vcmp.eq.s32.totalorder %v393, %v642
        %v644 = vsel %vm643, %v391, 0
        %v645 = vsel %vm395, %v644, 0
        %v646 = vand.u32 %v645, 65535
        %v647 = vshrl.u32 %v645, 16
        %v648 = vcvt.s32.f32 %v646
        %v649 = vcvt.s32.f32 %v647
        %650 = vadd.xlane.f32.xlu0 %v648
        %v651 = vpop.xlane.xlu0 %650
        %652 = vadd.xlane.f32.xlu0 %v649
        %v653 = vpop.xlane.xlu0 %652
        %v654 = vcvt.f32.s32 %v651
        %v655 = vcvt.f32.s32 %v653
        %v656 = vshll.u32 %v655, 16
        %v657 = vadd.s32 %v656, %v654
        %vm658 = vcmp.gt.f32.partialorder %v606, %v609
        %v659 = vmax.f32 %v606, %v609
        %v660 = vadd.s32 %v625, %v449
        %v661 = vsel %vm658, %v660, %v657
        %vm662 = vcmp.eq.s32.totalorder %v393, 3
        %v663 = vsel %vm662, %v659, %v593
        %v664 = vsel %vm662, %v661, %v594
        %665 = vst.msk [vmem:[#allocation2] sm:$0xff] %vm395, %v663
        %666 = vst.msk [vmem:[#allocation3] sm:$0xff] %vm395, %v664
      $region44: #{tpu_custom_call.1} parent=35 // pred_fallthru
        _
      // Predicated region
      $region45: #{tpu_custom_call.1} parent=35 // pred_check
        %p667 = pneg %p312
      $region46: #{tpu_custom_call.1} parent=35 // pred_check_branch
        %669 = sbr.rel (%p667) target = $region48
      $region47: #{tpu_custom_call.1} parent=35 // pred_region
        %v670 = vld [vmem:[#allocation3] sm:$0xff]
        %vm671 = vcmask 31744
        %672 = vst.msk [vmem:[%s311] sm:$0xff] %vm671, %v670
      $region48: #{tpu_custom_call.1} parent=35 // pred_fallthru
        _
      %p673 = scmp.lt.s32.totalorder %s20, 1
      %s674 = scalar_select %p673, %s20, 1
      %p675 = scmp.lt.s32.totalorder %s21, 0
      %s676 = scalar_select %p675, %s21, 0
      %s677 = sadd.s32 %s676, %s674
      %s678 = smul.addr %s677, 8
      %s679 = scalar_lea.vmem %s4, %s678
      // Predicated region
      $region49: #{tpu_custom_call.1} parent=35 // pred_check
        %p680 = pneg %p166
      $region50: #{tpu_custom_call.1} parent=35 // pred_check_branch
        %682 = sbr.rel (%p680) target = $region52
      $region51: #{tpu_custom_call.1} parent=35 // pred_region
        _
      $region52: #{tpu_custom_call.1} parent=35 // pred_fallthru
        _
    $region36: #{tpu_custom_call.1} parent=5 // pred_fallthru
      _
    %p683 = scmp.le.s32.totalorder 2, %s10
    // Predicated region
    $region53: #{tpu_custom_call.1} parent=5 // pred_check
      %p684 = pneg %p683
    $region54: #{tpu_custom_call.1} parent=5 // pred_check_branch
      %686 = sbr.rel (%p684) target = $region56
    $region55: #{tpu_custom_call.1} parent=5 // pred_region
      %s687 = ssub.s32 %s10, 2
      // Predicated region
      $region57: #{tpu_custom_call.1} parent=55 // pred_check
        %p688 = pneg %p172
      $region58: #{tpu_custom_call.1} parent=55 // pred_check_branch
        %690 = sbr.rel (%p688) target = $region60
      $region59: #{tpu_custom_call.1} parent=55 // pred_region
        %p691 = scmp.lt.s32.totalorder %s23, 1
        %s692 = scalar_select %p691, %s23, 1
        %p693 = scmp.lt.s32.totalorder %s24, 0
        %s694 = scalar_select %p693, %s24, 0
        %s695 = sadd.s32 %s694, %s692
        %s696 = smul.addr %s695, 8
        %s697 = scalar_lea.vmem %s4, %s696
      $region60: #{tpu_custom_call.1} parent=55 // pred_fallthru
        _
    $region56: #{tpu_custom_call.1} parent=5 // pred_fallthru
      _
  $region6: #{tpu_custom_call.1} parent=0 // loop_footer
    %s14 = sadd.s32 1, %s10
  $region7: #{tpu_custom_call.1} parent=0 // loop_footer_branch
    %9 = sbr.rel target = $region3
  $region8: #{tpu_custom_call.1} parent=0 // loop_exit
    _

</llo_original>
